<compile_context>
chip_gen: v7x
topology: tpu7x:2x2x1
jax: 0.10.0
libtpu: 0.0.40
codegen_flags: <defaults>
</compile_context>

<pallas_src>
import functools

import jax
import jax.numpy as jnp
from jax.experimental import pallas as pl
from jax.experimental.pallas import tpu as pltpu


# -----------------------------------------------------------------------------
# Pallas kernel: SCHead MLP + cross-entropy loss + accuracy
# -----------------------------------------------------------------------------
def _sc_head_kernel(tok_ref, w1_ref, b1_ref, w2_ref, b2_ref, oh_ref,
                    out_ref, acc_ref, *, pooling_mode, inv_seq_len):
    s = pl.program_id(1)
    ns = pl.num_programs(1)

    if pooling_mode == 'MEAN':
        # Stream-reduce this S chunk into the f32 accumulator (pure VPU adds;
        # the tok DMA for step s+1 pipelines behind it).
        @pl.when(s == 0)
        def _():
            acc_ref[...] = jnp.zeros_like(acc_ref)

        acc_ref[...] += jnp.sum(tok_ref[...].astype(jnp.float32), axis=1)

    # Epilogue: MLP + CE loss + accuracy, only on the last S step.
    @pl.when(s == ns - 1)
    def _():
        if pooling_mode == 'MEAN':
            pooled = acc_ref[...] * inv_seq_len              # (Bt, D) f32
        else:  # 'CLS' -- wrapper already sliced position 0; tok is (Bt, D)
            pooled = tok_ref[...].astype(jnp.float32)

        # mlpblock: Linear -> ReLU -> Linear (f32 accumulation on the MXU)
        h = jnp.dot(pooled, w1_ref[...], preferred_element_type=jnp.float32)
        h = jnp.maximum(h + b1_ref[...], 0.0)
        logits = jnp.dot(h, w2_ref[...], preferred_element_type=jnp.float32)
        logits = logits + b2_ref[...]                        # (Bt, C)

        onehot = oh_ref[...]                                 # (Bt, C) f32
        num_classes = logits.shape[-1]
        col = jax.lax.broadcasted_iota(jnp.int32, logits.shape, 1)

        # CrossEntropyLoss(reduction='none'): logsumexp(logits) - logits[label]
        m = jnp.max(logits, axis=-1, keepdims=True)          # (Bt, 1)
        lse = m[:, 0] + jnp.log(jnp.sum(jnp.exp(logits - m), axis=-1))
        picked = jnp.sum(logits * onehot, axis=-1)
        loss = lse - picked                                  # (Bt,)

        # accuracy: (argmax(logits, -1) == label).float()  (first-max index)
        amax = jnp.min(jnp.where(logits == m, col, num_classes),
                       axis=-1, keepdims=True)               # (Bt, 1)
        accu = jnp.sum(jnp.where(col == amax, onehot, 0.0), axis=-1)  # (Bt,)

        # Lane-dense combined output slab: row 0 = loss, row 1 = accu.
        out_ref[0, :] = loss
        out_ref[1, :] = accu


def sc_head_pallas(token_out, w1, b1, w2, b2, label, pooling_mode,
                   *, b_tile=8, vmem_budget_bytes=8 * 1024 * 1024):
    """Fused SCHead + CE-loss + accuracy.  Returns (loss[B], accu[B])."""
    B, S, D = token_out.shape
    H = w1.shape[1]
    C = w2.shape[1]

    b_tile = max(8, int(b_tile))                  # sublane-friendly batch tile
    B_pad = ((B + b_tile - 1) // b_tile) * b_tile
    nb = B_pad // b_tile

    # One-hot labels (layout plumbing in the wrapper; matches logits layout).
    onehot = (label[:, None] == jnp.arange(C, dtype=label.dtype)[None, :]
              ).astype(jnp.float32)
    if B_pad != B:
        onehot = jnp.pad(onehot, ((0, B_pad - B), (0, 0)))

    itemsize = jnp.dtype(token_out.dtype).itemsize

    if pooling_mode == 'CLS':
        # Only sequence position 0 is needed -> never stream (B, S, D).
        tok = token_out[:, 0, :]                              # (B, D)
        if B_pad != B:
            tok = jnp.pad(tok, ((0, B_pad - B), (0, 0)))
        ns = 1
        tok_spec = pl.BlockSpec((b_tile, D), lambda b, s: (b, 0))
        tok_block_bytes = b_tile * D * itemsize
        inv_seq_len = 1.0
    elif pooling_mode == 'MEAN':
        # Largest S tile (multiple of 8) whose double-buffered tok block fits
        # the VMEM budget (keeps v7x's 64 MiB happy; bigger on v5e/v6e if the
        # budget is raised).
        s_tile = max(8, (vmem_budget_bytes // (2 * b_tile * D * itemsize))
                     // 8 * 8)
        s_tile = min(s_tile, ((S + 7) // 8) * 8)
        S_pad = ((S + s_tile - 1) // s_tile) * s_tile
        ns = S_pad // s_tile
        tok = token_out
        if B_pad != B or S_pad != S:
            tok = jnp.pad(tok, ((0, B_pad - B), (0, S_pad - S), (0, 0)))
        # NOTE: if the streamed reduction shows exposed DMA, this spec can take
        # pipeline_mode=pl.Buffered(3) at modest extra VMEM cost.
        tok_spec = pl.BlockSpec((b_tile, s_tile, D), lambda b, s: (b, s, 0))
        tok_block_bytes = b_tile * s_tile * D * itemsize
        inv_seq_len = 1.0 / S          # padded rows are zero; divide by true S
    else:
        raise Exception()

    kernel = functools.partial(_sc_head_kernel, pooling_mode=pooling_mode,
                               inv_seq_len=inv_seq_len)

    vmem_limit = int(min(100 * 1024 * 1024,
                         max(32 * 1024 * 1024,
                             4 * tok_block_bytes + 8 * 1024 * 1024)))

    out = pl.pallas_call(
        kernel,
        grid_spec=pltpu.PrefetchScalarGridSpec(
            num_scalar_prefetch=0,
            grid=(nb, ns),
            in_specs=[
                tok_spec,
                pl.BlockSpec((D, H), lambda b, s: (0, 0)),
                pl.BlockSpec((1, H), lambda b, s: (0, 0)),
                pl.BlockSpec((H, C), lambda b, s: (0, 0)),
                pl.BlockSpec((1, C), lambda b, s: (0, 0)),
                pl.BlockSpec((b_tile, C), lambda b, s: (b, 0)),
            ],
            out_specs=pl.BlockSpec((None, 2, b_tile), lambda b, s: (b, 0, 0)),
            scratch_shapes=[pltpu.VMEM((b_tile, D), jnp.float32)],
        ),
        out_shape=jax.ShapeDtypeStruct((nb, 2, b_tile), jnp.float32),
        compiler_params=pltpu.CompilerParams(
            dimension_semantics=("parallel", "arbitrary"),
            vmem_limit_bytes=vmem_limit),
    )(tok, w1, b1[None, :], w2, b2[None, :], onehot)

    loss = out[:, 0, :].reshape(B_pad)[:B]
    accu = out[:, 1, :].reshape(B_pad)[:B]
    return loss, accu


# -----------------------------------------------------------------------------
# Plain-JAX glue mirroring the PyTorch module
# -----------------------------------------------------------------------------
def append_cls(inp, mask, vocab_size):
    batch = inp.shape[0]
    cls_id = jnp.full((batch, 1), vocab_size - 1, dtype=inp.dtype)
    cls_mask = jnp.ones((batch, 1), dtype=mask.dtype)
    inp = jnp.concatenate([cls_id, inp[:, :-1]], axis=-1)
    mask = jnp.concatenate([cls_mask, mask[:, :-1]], axis=-1)
    return inp, mask


# TODO(synk): the transformer backbone `Model(config)` (and the memorizing /
# KNN path) is not defined in the provided source; a deterministic
# embedding-lookup stand-in produces token_out of shape (B, S, D) with the
# same interface.
def backbone_stand_in(embed, input_ids, mask):
    return embed[input_ids] * mask[..., None]


def model_for_sc_forward(params, *, input_ids_0, mask_0, label,
                         pooling_mode, vocab_size):
    if pooling_mode == 'CLS':
        input_ids_0, mask_0 = append_cls(input_ids_0, mask_0, vocab_size)
    token_out_0 = backbone_stand_in(params['embed'], input_ids_0, mask_0)
    loss, accu = sc_head_pallas(token_out_0, params['w1'], params['b1'],
                                params['w2'], params['b2'], label,
                                pooling_mode)
    return {'loss': loss, 'accu': accu}


def reference_forward(params, *, input_ids_0, mask_0, label,
                      pooling_mode, vocab_size):
    if pooling_mode == 'CLS':
        input_ids_0, mask_0 = append_cls(input_ids_0, mask_0, vocab_size)
    tok = backbone_stand_in(params['embed'], input_ids_0, mask_0)
    if pooling_mode == 'MEAN':
        pooled = jnp.mean(tok, axis=1)
    else:
        pooled = tok[:, 0, :]
    h = jnp.maximum(pooled @ params['w1'] + params['b1'], 0.0)
    logits = h @ params['w2'] + params['b2']
    loss = jax.nn.logsumexp(logits, axis=-1) - jnp.take_along_axis(
        logits, label[:, None], axis=-1)[:, 0]
    accu = (jnp.argmax(logits, axis=-1) == label).astype(jnp.float32)
    return {'loss': loss, 'accu': accu}


# -----------------------------------------------------------------------------
if __name__ == "__main__":
    # config: small, consistent with the module
    B, S, D, H, C = 2, 8, 32, 64, 4
    vocab_size = 32

    key = jax.random.PRNGKey(0)
    k_emb, k_w1, k_b1, k_w2, k_b2, k_ids, k_lbl = jax.random.split(key, 7)

    params = {
        'embed': jax.random.normal(k_emb, (vocab_size, D), jnp.float32) * 0.1,
        'w1': jax.random.normal(k_w1, (D, H), jnp.float32) * 0.1,
        'b1': jax.random.normal(k_b1, (H,), jnp.float32) * 0.01,
        'w2': jax.random.normal(k_w2, (H, C), jnp.float32) * 0.1,
        'b2': jax.random.normal(k_b2, (C,), jnp.float32) * 0.01,
    }

    input_ids_0 = jax.random.randint(k_ids, (B, S), 0, vocab_size, jnp.int32)
    mask_0 = jnp.ones((B, S), jnp.float32)
    label = jax.random.randint(k_lbl, (B,), 0, C, jnp.int32)

    for pooling_mode in ('MEAN', 'CLS'):
        out = model_for_sc_forward(params, input_ids_0=input_ids_0,
                                   mask_0=mask_0, label=label,
                                   pooling_mode=pooling_mode,
                                   vocab_size=vocab_size)
        jax.block_until_ready(out)

        ref = reference_forward(params, input_ids_0=input_ids_0,
                                mask_0=mask_0, label=label,
                                pooling_mode=pooling_mode,
                                vocab_size=vocab_size)
        assert jnp.allclose(out['loss'], ref['loss'],
                            rtol=1e-5, atol=1e-5), pooling_mode
        assert jnp.allclose(out['accu'], ref['accu']), pooling_mode

    print("KERNEL_OK")
</pallas_src>

<mosaic_0001>
module attributes {stable_mosaic.version = 11 : i64} {
  func.func @_sc_head_kernel(%arg0: i32, %arg1: i32, %arg2: memref<8x8x32xf32, #tpu.memory_space<vmem>>, %arg3: memref<32x64xf32, #tpu.memory_space<vmem>>, %arg4: memref<1x64xf32, #tpu.memory_space<vmem>>, %arg5: memref<64x4xf32, #tpu.memory_space<vmem>>, %arg6: memref<1x4xf32, #tpu.memory_space<vmem>>, %arg7: memref<8x4xf32, #tpu.memory_space<vmem>>, %arg8: memref<1x2x8xf32, #tpu.memory_space<vmem>>, %arg9: memref<8x32xf32, #tpu.memory_space<vmem>>) attributes {dimension_semantics = [#tpu.dimension_semantics<parallel>, #tpu.dimension_semantics<arbitrary>], iteration_bounds = array<i64: 1, 1>, scalar_prefetch = 0 : i64, scratch_operands = 1 : i64, tpu.core_type = #tpu.core_type<tc>, window_params = [{transform_indices = @transform_0, window_bounds = array<i64: 8, 8, 32>}, {pipeline_mode = #tpu.pipeline_mode<synchronous>, transform_indices = @transform_1, window_bounds = array<i64: 32, 64>}, {pipeline_mode = #tpu.pipeline_mode<synchronous>, transform_indices = @transform_2, window_bounds = array<i64: 1, 64>}, {pipeline_mode = #tpu.pipeline_mode<synchronous>, transform_indices = @transform_3, window_bounds = array<i64: 64, 4>}, {pipeline_mode = #tpu.pipeline_mode<synchronous>, transform_indices = @transform_4, window_bounds = array<i64: 1, 4>}, {transform_indices = @transform_5, window_bounds = array<i64: 8, 4>}, {transform_indices = @transform_6, window_bounds = array<i64: 1, 2, 8>}]} {
    %c0_i32 = arith.constant 0 : i32
    %0 = arith.cmpi eq, %arg1, %c0_i32 : i32
    %1 = arith.extui %0 : i1 to i32
    %c0_i32_0 = arith.constant 0 : i32
    %2 = arith.cmpi ne, %1, %c0_i32_0 : i32
    scf.if %2 {
      %cst_9 = arith.constant 0.000000e+00 : f32
      %11 = vector.broadcast %cst_9 : f32 to vector<8x32xf32>
      %c0_10 = arith.constant 0 : index
      %c0_11 = arith.constant 0 : index
      %12 = vector.load %arg9[%c0_10, %c0_11] : memref<8x32xf32, #tpu.memory_space<vmem>>, vector<8x32xf32>
      tpu.vector_store %arg9[%c0_10, %c0_11], %11 {strides = array<i32>} : memref<8x32xf32, #tpu.memory_space<vmem>>, vector<8x32xf32>,
    } else {
    }
    %c0 = arith.constant 0 : index
    %c0_1 = arith.constant 0 : index
    %3 = vector.load %arg9[%c0, %c0_1] : memref<8x32xf32, #tpu.memory_space<vmem>>, vector<8x32xf32>
    %c0_2 = arith.constant 0 : index
    %c0_3 = arith.constant 0 : index
    %c0_4 = arith.constant 0 : index
    %4 = vector.load %arg2[%c0_2, %c0_3, %c0_4] : memref<8x8x32xf32, #tpu.memory_space<vmem>>, vector<8x8x32xf32>
    %cst = arith.constant dense<0.000000e+00> : vector<8x32xf32>
    %5 = vector.multi_reduction <add>, %4, %cst [1] : vector<8x8x32xf32> to vector<8x32xf32>
    %6 = arith.addf %3, %5 : vector<8x32xf32>
    %c0_5 = arith.constant 0 : index
    %c0_6 = arith.constant 0 : index
    %7 = vector.load %arg9[%c0_5, %c0_6] : memref<8x32xf32, #tpu.memory_space<vmem>>, vector<8x32xf32>
    tpu.vector_store %arg9[%c0_5, %c0_6], %6 {strides = array<i32>} : memref<8x32xf32, #tpu.memory_space<vmem>>, vector<8x32xf32>,
    %c0_i32_7 = arith.constant 0 : i32
    %8 = arith.cmpi eq, %arg1, %c0_i32_7 : i32
    %9 = arith.extui %8 : i1 to i32
    %c0_i32_8 = arith.constant 0 : i32
    %10 = arith.cmpi ne, %9, %c0_i32_8 : i32
    scf.if %10 {
      %c0_9 = arith.constant 0 : index
      %c0_10 = arith.constant 0 : index
      %11 = vector.load %arg9[%c0_9, %c0_10] : memref<8x32xf32, #tpu.memory_space<vmem>>, vector<8x32xf32>
      %cst_11 = arith.constant 1.250000e-01 : f32
      %12 = vector.broadcast %cst_11 : f32 to vector<8x32xf32>
      %13 = arith.mulf %11, %12 : vector<8x32xf32>
      %c0_12 = arith.constant 0 : index
      %c0_13 = arith.constant 0 : index
      %14 = vector.load %arg3[%c0_12, %c0_13] : memref<32x64xf32, #tpu.memory_space<vmem>>, vector<32x64xf32>
      %cst_14 = arith.constant dense<0.000000e+00> : vector<8x64xf32>
      %15 = tpu.matmul %13, %14, %cst_14 {dimension_numbers = #tpu.dot_dimension_numbers<[1], [0], [0], [1], [0, 0, 1, 1], [], []>} : vector<8x32xf32>, vector<32x64xf32>, vector<8x64xf32> -> vector<8x64xf32>
      %c0_15 = arith.constant 0 : index
      %c0_16 = arith.constant 0 : index
      %16 = vector.load %arg4[%c0_15, %c0_16] : memref<1x64xf32, #tpu.memory_space<vmem>>, vector<1x64xf32>
      %17 = vector.broadcast %16 : vector<1x64xf32> to vector<8x64xf32>
      %18 = arith.addf %15, %17 : vector<8x64xf32>
      %cst_17 = arith.constant 0.000000e+00 : f32
      %19 = vector.broadcast %cst_17 : f32 to vector<8x64xf32>
      %20 = arith.maximumf %18, %19 : vector<8x64xf32>
      %c0_18 = arith.constant 0 : index
      %c0_19 = arith.constant 0 : index
      %21 = vector.load %arg5[%c0_18, %c0_19] : memref<64x4xf32, #tpu.memory_space<vmem>>, vector<64x4xf32>
      %cst_20 = arith.constant dense<0.000000e+00> : vector<8x4xf32>
      %22 = tpu.matmul %20, %21, %cst_20 {dimension_numbers = #tpu.dot_dimension_numbers<[1], [0], [0], [1], [0, 0, 1, 1], [], []>} : vector<8x64xf32>, vector<64x4xf32>, vector<8x4xf32> -> vector<8x4xf32>
      %c0_21 = arith.constant 0 : index
      %c0_22 = arith.constant 0 : index
      %23 = vector.load %arg6[%c0_21, %c0_22] : memref<1x4xf32, #tpu.memory_space<vmem>>, vector<1x4xf32>
      %24 = vector.broadcast %23 : vector<1x4xf32> to vector<8x4xf32>
      %25 = arith.addf %22, %24 : vector<8x4xf32>
      %c0_23 = arith.constant 0 : index
      %c0_24 = arith.constant 0 : index
      %26 = vector.load %arg7[%c0_23, %c0_24] : memref<8x4xf32, #tpu.memory_space<vmem>>, vector<8x4xf32>
      %27 = tpu.iota {dimensions = array<i32: 1>} : vector<8x4xi32>
      %cst_25 = arith.constant dense<0xFF800000> : vector<8xf32>
      %28 = vector.multi_reduction <maximumf>, %25, %cst_25 [1] : vector<8x4xf32> to vector<8xf32>
      %29 = vector.shape_cast %28 : vector<8xf32> to vector<8x1xf32>
      %30 = vector.shape_cast %29 : vector<8x1xf32> to vector<8xf32>
      %31 = vector.broadcast %29 : vector<8x1xf32> to vector<8x4xf32>
      %32 = arith.subf %25, %31 : vector<8x4xf32>
      %33 = math.exp %32 : vector<8x4xf32>
      %cst_26 = arith.constant dense<0.000000e+00> : vector<8xf32>
      %34 = vector.multi_reduction <add>, %33, %cst_26 [1] : vector<8x4xf32> to vector<8xf32>
      %35 = math.log %34 : vector<8xf32>
      %36 = arith.addf %30, %35 : vector<8xf32>
      %37 = arith.mulf %25, %26 : vector<8x4xf32>
      %cst_27 = arith.constant dense<0.000000e+00> : vector<8xf32>
      %38 = vector.multi_reduction <add>, %37, %cst_27 [1] : vector<8x4xf32> to vector<8xf32>
      %39 = arith.subf %36, %38 : vector<8xf32>
      %40 = vector.broadcast %29 : vector<8x1xf32> to vector<8x4xf32>
      %41 = arith.cmpf oeq, %25, %40 : vector<8x4xf32>
      %c4_i32 = arith.constant 4 : i32
      %42 = vector.broadcast %c4_i32 : i32 to vector<8x4xi32>
      %43 = arith.select %41, %27, %42 : vector<8x4xi1>, vector<8x4xi32>
      %cst_28 = arith.constant dense<2147483647> : vector<8xi32>
      %44 = vector.multi_reduction <minsi>, %43, %cst_28 [1] : vector<8x4xi32> to vector<8xi32>
      %45 = vector.shape_cast %44 : vector<8xi32> to vector<8x1xi32>
      %46 = vector.broadcast %45 : vector<8x1xi32> to vector<8x4xi32>
      %47 = arith.cmpi eq, %27, %46 : vector<8x4xi32>
      %cst_29 = arith.constant 0.000000e+00 : f32
      %48 = vector.broadcast %cst_29 : f32 to vector<8x4xf32>
      %49 = arith.select %47, %26, %48 : vector<8x4xi1>, vector<8x4xf32>
      %cst_30 = arith.constant dense<0.000000e+00> : vector<8xf32>
      %50 = vector.multi_reduction <add>, %49, %cst_30 [1] : vector<8x4xf32> to vector<8xf32>
      %c0_31 = arith.constant 0 : index
      %c0_32 = arith.constant 0 : index
      %c0_33 = arith.constant 0 : index
      %51 = vector.load %arg8[%c0_31, %c0_32, %c0_33] : memref<1x2x8xf32, #tpu.memory_space<vmem>>, vector<1x1x8xf32>
      %52 = vector.shape_cast %51 : vector<1x1x8xf32> to vector<8xf32>
      %53 = vector.shape_cast %39 : vector<8xf32> to vector<1x1x8xf32>
      tpu.vector_store %arg8[%c0_31, %c0_32, %c0_33], %53 {strides = array<i32>} : memref<1x2x8xf32, #tpu.memory_space<vmem>>, vector<1x1x8xf32>,
      %c0_34 = arith.constant 0 : index
      %c1 = arith.constant 1 : index
      %c0_35 = arith.constant 0 : index
      %54 = vector.load %arg8[%c0_34, %c1, %c0_35] : memref<1x2x8xf32, #tpu.memory_space<vmem>>, vector<1x1x8xf32>
      %55 = vector.shape_cast %54 : vector<1x1x8xf32> to vector<8xf32>
      %56 = vector.shape_cast %50 : vector<8xf32> to vector<1x1x8xf32>
      tpu.vector_store %arg8[%c0_34, %c1, %c0_35], %56 {strides = array<i32>} : memref<1x2x8xf32, #tpu.memory_space<vmem>>, vector<1x1x8xf32>,
    } else {
    }
    return
  }
  func.func @transform_0(%arg0: i32, %arg1: i32) -> (i32, i32, i32) {
    %c0_i32 = arith.constant 0 : i32
    %c0_i32_0 = arith.constant 0 : i32
    return %arg0, %arg1, %c0_i32 : i32, i32, i32
  }
  func.func @transform_1(%arg0: i32, %arg1: i32) -> (i32, i32) {
    %c0_i32 = arith.constant 0 : i32
    %c0_i32_0 = arith.constant 0 : i32
    %c0_i32_1 = arith.constant 0 : i32
    return %c0_i32, %c0_i32_0 : i32, i32
  }
  func.func @transform_2(%arg0: i32, %arg1: i32) -> (i32, i32) {
    %c0_i32 = arith.constant 0 : i32
    %c0_i32_0 = arith.constant 0 : i32
    %c0_i32_1 = arith.constant 0 : i32
    return %c0_i32, %c0_i32_0 : i32, i32
  }
  func.func @transform_3(%arg0: i32, %arg1: i32) -> (i32, i32) {
    %c0_i32 = arith.constant 0 : i32
    %c0_i32_0 = arith.constant 0 : i32
    %c0_i32_1 = arith.constant 0 : i32
    return %c0_i32, %c0_i32_0 : i32, i32
  }
  func.func @transform_4(%arg0: i32, %arg1: i32) -> (i32, i32) {
    %c0_i32 = arith.constant 0 : i32
    %c0_i32_0 = arith.constant 0 : i32
    %c0_i32_1 = arith.constant 0 : i32
    return %c0_i32, %c0_i32_0 : i32, i32
  }
  func.func @transform_5(%arg0: i32, %arg1: i32) -> (i32, i32) {
    %c0_i32 = arith.constant 0 : i32
    %c0_i32_0 = arith.constant 0 : i32
    return %arg0, %c0_i32 : i32, i32
  }
  func.func @transform_6(%arg0: i32, %arg1: i32) -> (i32, i32, i32) {
    %c0_i32 = arith.constant 0 : i32
    %c0_i32_0 = arith.constant 0 : i32
    %c0_i32_1 = arith.constant 0 : i32
    return %arg0, %c0_i32, %c0_i32_0 : i32, i32, i32
  }
}

</mosaic_0001>

<llo_original>
// kernel: tpu_custom_call.1
$region0: #{tpu_custom_call.1}
  #allocation0 [shape = 'u32[]', space=smem, size = 0x4, offset = 0x4, fixed_abs, tag = 'smem constant byte address 0x4 - core index']
  #allocation1 [shape = 'u32[144,128]{1,0:T(1,128)}', space=vmem, size = 0x12000, scoped, tag = 'internal scratch']
  #allocation2 [shape = 'f32[8,32]{1,0:T(8,128)}', space=vmem, size = 0x1000, scoped, tag = 'scratch operand']
  %s0 = inlined_call_operand.vmem [shape: f32[8,8,32], index: 0, kind: input, shape index: {}]
  %s1 = inlined_call_operand.hbm [shape: f32[32,64], index: 1, kind: input, shape index: {}]
  %s2 = inlined_call_operand.vmem [shape: f32[1,64], index: 2, kind: input, shape index: {}]
  %s3 = inlined_call_operand.vmem [shape: f32[64,4], index: 3, kind: input, shape index: {}]
  %s4 = inlined_call_operand.vmem [shape: f32[1,4], index: 4, kind: input, shape index: {}]
  %s5 = inlined_call_operand.vmem [shape: f32[8,4], index: 5, kind: input, shape index: {}]
  %s6 = inlined_call_operand.hbm [shape: f32[1,2,8], index: 6, kind: output, shape index: {}]
  %s7 = sld [smem:[#allocation0]]
  $region46: #{tpu_custom_call.1} parent=0
    _
  %s9 = ssub.s32 1, %s7
  %s10 = scalar_select 0, %s9, %s7
  $region1: #{tpu_custom_call.1} parent=0
    #allocation3 [shape = 'u8[16384]{0}', space=vmem, size = 0x4000, scoped, tag = 'input window, operand 1, single buffered']
    #allocation4 [shape = 's32[1]{0}', space=sflag, size = 0x4, scoped, tag = 'scoped memory for tpu_custom_call.1']
    #allocation5 [shape = 's32[1]{0}', space=sflag, size = 0x4, scoped, tag = 'scoped memory for tpu_custom_call.1']
    #allocation6 [shape = 'u8[1024]{0}', space=vmem, size = 0x400, scoped, tag = 'output window, operand 0, single buffered']
    %11 = vsyncpa [#allocation4], 0
    %12 = vsyncpa [#allocation5], 0
    // Predicated region
    $region2: #{tpu_custom_call.1} parent=1 // pred_check
      _
    $region3: #{tpu_custom_call.1} parent=1 // pred_check_branch
      %14 = sbr.rel (0) target = $region5
    $region4: #{tpu_custom_call.1} parent=1 // pred_region
      _
    $region5: #{tpu_custom_call.1} parent=1 // pred_fallthru
      _
    // Predicated region
    $region6: #{tpu_custom_call.1} parent=1 // pred_check
      _
    $region7: #{tpu_custom_call.1} parent=1 // pred_check_branch
      %16 = sbr.rel (0) target = $region9
    $region8: #{tpu_custom_call.1} parent=1 // pred_region
      %s18 = ssub.s32 512, 512
      %19 = vsyncadd [#allocation4], %s18
      %s20 = sshll.u32 [#allocation3], 4
      %s21 = int_to_ptr.vmem [resolvable:$true] %s20
      %26 = dma.hbm_to_vmem [thread:$0]  %s1, 512, %s21, [#allocation4], 128, 128, 8
    $region9: #{tpu_custom_call.1} parent=1 // pred_fallthru
      _
    // Predicated region
    $region10: #{tpu_custom_call.1} parent=1 // pred_check
      _
    $region11: #{tpu_custom_call.1} parent=1 // pred_check_branch
      %28 = sbr.rel (0) target = $region13
    $region12: #{tpu_custom_call.1} parent=1 // pred_region
      _
    $region13: #{tpu_custom_call.1} parent=1 // pred_fallthru
      _
    // Predicated region
    $region14: #{tpu_custom_call.1} parent=1 // pred_check
      _
    $region15: #{tpu_custom_call.1} parent=1 // pred_check_branch
      %30 = sbr.rel (0) target = $region17
    $region16: #{tpu_custom_call.1} parent=1 // pred_region
      _
    $region17: #{tpu_custom_call.1} parent=1 // pred_fallthru
      _
    // Predicated region
    $region18: #{tpu_custom_call.1} parent=1 // pred_check
      _
    $region19: #{tpu_custom_call.1} parent=1 // pred_check_branch
      %32 = sbr.rel (0) target = $region21
    $region20: #{tpu_custom_call.1} parent=1 // pred_region
      _
    $region21: #{tpu_custom_call.1} parent=1 // pred_fallthru
      _
    // Predicated region
    $region22: #{tpu_custom_call.1} parent=1 // pred_check
      _
    $region23: #{tpu_custom_call.1} parent=1 // pred_check_branch
      %34 = sbr.rel (0) target = $region25
    $region24: #{tpu_custom_call.1} parent=1 // pred_region
      _
    $region25: #{tpu_custom_call.1} parent=1 // pred_fallthru
      _
    // Predicated region
    $region26: #{tpu_custom_call.1} parent=1 // pred_check
      _
    $region27: #{tpu_custom_call.1} parent=1 // pred_check_branch
      %36 = sbr.rel (0) target = $region29
    $region28: #{tpu_custom_call.1} parent=1 // pred_region
      %37 = dma.done [#allocation4], 512
    $region29: #{tpu_custom_call.1} parent=1 // pred_fallthru
      _
    %p38 = scmp.eq.s32.totalorder 0, 0
    // Predicated region
    $region30: #{tpu_custom_call.1} parent=1 // pred_check
      %p39 = pneg %p38
    $region31: #{tpu_custom_call.1} parent=1 // pred_check_branch
      %41 = sbr.rel (%p39) target = $region33
    $region32: #{tpu_custom_call.1} parent=1 // pred_region
      %vm42 = vcmask 261120
      %43 = vst.msk [vmem:[#allocation2] sm:$0xff] %vm42, 0.0
    $region33: #{tpu_custom_call.1} parent=1 // pred_fallthru
      _
    %v44 = vld [vmem:[#allocation2] sm:$0xff]
    %v45 = vld [vmem:[%s0] sm:$0xff]
    %v46 = vld [vmem:[%s0 + $0x8] sm:$0xff]
    %v47 = vld [vmem:[%s0 + $0x10] sm:$0xff]
    %v48 = vld [vmem:[%s0 + $0x18] sm:$0xff]
    %v49 = vld [vmem:[%s0 + $0x20] sm:$0xff]
    %v50 = vld [vmem:[%s0 + $0x28] sm:$0xff]
    %v51 = vld [vmem:[%s0 + $0x30] sm:$0xff]
    %v52 = vld [vmem:[%s0 + $0x38] sm:$0xff]
    %vm53 = vcmask 261120
    %v54 = vsel %vm53, %v45, 0.0
    %v55 = vrot.slane %v54, 4
    %v56 = vadd.f32 %v54, %v55
    %v57 = vrot.slane %v56, 2
    %v58 = vadd.f32 %v56, %v57
    %v59 = vrot.slane %v58, 1
    %v60 = vadd.f32 %v58, %v59
    %v61 = vsel %vm53, %v46, 0.0
    %v62 = vrot.slane %v61, 4
    %v63 = vadd.f32 %v61, %v62
    %v64 = vrot.slane %v63, 2
    %v65 = vadd.f32 %v63, %v64
    %v66 = vrot.slane %v65, 1
    %v67 = vadd.f32 %v65, %v66
    %v68 = vsel %vm53, %v47, 0.0
    %v69 = vrot.slane %v68, 4
    %v70 = vadd.f32 %v68, %v69
    %v71 = vrot.slane %v70, 2
    %v72 = vadd.f32 %v70, %v71
    %v73 = vrot.slane %v72, 1
    %v74 = vadd.f32 %v72, %v73
    %v75 = vsel %vm53, %v48, 0.0
    %v76 = vrot.slane %v75, 4
    %v77 = vadd.f32 %v75, %v76
    %v78 = vrot.slane %v77, 2
    %v79 = vadd.f32 %v77, %v78
    %v80 = vrot.slane %v79, 1
    %v81 = vadd.f32 %v79, %v80
    %v82 = vsel %vm53, %v49, 0.0
    %v83 = vrot.slane %v82, 4
    %v84 = vadd.f32 %v82, %v83
    %v85 = vrot.slane %v84, 2
    %v86 = vadd.f32 %v84, %v85
    %v87 = vrot.slane %v86, 1
    %v88 = vadd.f32 %v86, %v87
    %v89 = vsel %vm53, %v50, 0.0
    %v90 = vrot.slane %v89, 4
    %v91 = vadd.f32 %v89, %v90
    %v92 = vrot.slane %v91, 2
    %v93 = vadd.f32 %v91, %v92
    %v94 = vrot.slane %v93, 1
    %v95 = vadd.f32 %v93, %v94
    %v96 = vsel %vm53, %v51, 0.0
    %v97 = vrot.slane %v96, 4
    %v98 = vadd.f32 %v96, %v97
    %v99 = vrot.slane %v98, 2
    %v100 = vadd.f32 %v98, %v99
    %v101 = vrot.slane %v100, 1
    %v102 = vadd.f32 %v100, %v101
    %v103 = vsel %vm53, %v52, 0.0
    %v104 = vrot.slane %v103, 4
    %v105 = vadd.f32 %v103, %v104
    %v106 = vrot.slane %v105, 2
    %v107 = vadd.f32 %v105, %v106
    %v108 = vrot.slane %v107, 1
    %v109 = vadd.f32 %v107, %v108
    %vm118 = vcmask 1041409
    %v119 = vsel %vm118, %v67, %v60
    %vm120 = vcmask 1042434
    %v121 = vsel %vm120, %v74, %v119
    %vm122 = vcmask 1043459
    %v123 = vsel %vm122, %v81, %v121
    %vm124 = vcmask 1044484
    %v125 = vsel %vm124, %v88, %v123
    %vm126 = vcmask 1045509
    %v127 = vsel %vm126, %v95, %v125
    %vm128 = vcmask 1046534
    %v129 = vsel %vm128, %v102, %v127
    %vm130 = vcmask 1047559
    %v131 = vsel %vm130, %v109, %v129
    %v133 = vadd.f32 %v44, %v131
    %134 = vst.msk [vmem:[#allocation2] sm:$0xff] %vm53, %v133
    // Predicated region
    $region34: #{tpu_custom_call.1} parent=1 // pred_check
      %p135 = pneg %p38
    $region35: #{tpu_custom_call.1} parent=1 // pred_check_branch
      %137 = sbr.rel (%p135) target = $region37
    $region36: #{tpu_custom_call.1} parent=1 // pred_region
      %v138 = vld [vmem:[#allocation2] sm:$0xff]
      %v139 = vmul.f32 %v138, 0.125
      %v140 = vld [vmem:[#allocation3] sm:$0xff]
      %v141 = vld [vmem:[#allocation3 + $0x8] sm:$0xff]
      %v142 = vld [vmem:[#allocation3 + $0x10] sm:$0xff]
      %v143 = vld [vmem:[#allocation3 + $0x18] sm:$0xff]
      %v144 = vld [vmem:[%s2] sm:$0x1]
      %v146 = vlaneseq
      %v147 = vshrl.u32 %v146, 7
      %v148 = vsub.s32 0, %v147
      %v149 = vrot.slane %v144, %v148
      %v152 = vsel %vm53, %v139, 0
      %154 = vmatprep.subr.mxu0 0.0
      %155 = vmatpush1.msra.mxu0 %v140
      %156 = vmatprep.subr.mxu0 0.0
      %157 = vmatpush1.msra.mxu0 %v141
      %158 = vmatprep.subr.mxu0 0.0
      %159 = vmatpush1.msra.mxu0 %v142
      %160 = vmatprep.subr.mxu0 0.0
      %161 = vmatpush1.msra.mxu0 %v143
      %162 = vmatprep.subr.mxu0 0.0
      %163 = vmatpush1.msra.mxu0 0.0
      %164 = vmatprep.subr.mxu0 0.0
      %165 = vmatpush1.msra.mxu0 0.0
      %166 = vmatprep.subr.mxu0 0.0
      %167 = vmatpush1.msra.mxu0 0.0
      %168 = vmatprep.subr.mxu0 0.0
      %169 = vmatpush1.msra.mxu0 0.0
      %170 = vmatprep.subr.mxu0 0.0
      %171 = vmatpush1.msra.mxu0 0.0
      %172 = vmatprep.subr.mxu0 0.0
      %173 = vmatpush1.msra.mxu0 0.0
      %174 = vmatprep.subr.mxu0 0.0
      %175 = vmatpush1.msra.mxu0 0.0
      %176 = vmatprep.subr.mxu0 0.0
      %177 = vmatpush1.msra.mxu0 0.0
      %178 = vmatprep.subr.mxu0 0.0
      %179 = vmatpush1.msra.mxu0 0.0
      %180 = vmatprep.subr.mxu0 0.0
      %181 = vmatpush1.msra.mxu0 0.0
      %182 = vmatprep.subr.mxu0 0.0
      %183 = vmatpush1.msra.mxu0 0.0
      %184 = vmatprep.subr.mxu0 0.0
      %185 = vmatpush1.msra.mxu0 0.0
      %186 = vmatprep.subr.mxu0 0.0
      %187 = vmatpush1.msra.mxu0 0.0
      %188 = vmatprep.subr.mxu0 0.0
      %189 = vmatpush1.msra.mxu0 0.0
      %190 = vmatprep.subr.mxu0 0.0
      %191 = vmatpush1.msra.mxu0 0.0
      %192 = vmatprep.subr.mxu0 0.0
      %193 = vmatpush1.msra.mxu0 0.0
      %194 = vmatprep.subr.mxu0 0.0
      %195 = vmatpush1.msra.mxu0 0.0
      %196 = vmatprep.subr.mxu0 0.0
      %197 = vmatpush1.msra.mxu0 0.0
      %198 = vmatprep.subr.mxu0 0.0
      %199 = vmatpush1.msra.mxu0 0.0
      %200 = vmatprep.subr.mxu0 0.0
      %201 = vmatpush1.msra.mxu0 0.0
      %202 = vmatprep.subr.mxu0 0.0
      %203 = vmatpush1.msra.mxu0 0.0
      %204 = vmatprep.subr.mxu0 0.0
      %205 = vmatpush1.msra.mxu0 0.0
      %206 = vmatprep.subr.mxu0 0.0
      %207 = vmatpush1.msra.mxu0 0.0
      %208 = vmatprep.subr.mxu0 0.0
      %209 = vmatpush1.msra.mxu0 0.0
      %210 = vmatprep.subr.mxu0 0.0
      %211 = vmatpush1.msra.mxu0 0.0
      %212 = vmatprep.subr.mxu0 0.0
      %213 = vmatpush1.msra.mxu0 0.0
      %214 = vmatprep.subr.mxu0 0.0
      %215 = vmatpush1.msra.mxu0 0.0
      %216 = vmatprep.subr.mxu0 0.0
      %217 = vmatpush1.msra.mxu0 0.0
      %218 = vmatprep.mubr.f32.mxu0 0.0
      %219 = vmatmul.mubr.f32.gmra.mrb[0].mxu0 %v152
      %v220 = vpop.f32.mrb[0].mxu0
      %v221 = vadd.f32 %v149, %v220
      %v222 = vpop.f32.mrb[0].mxu0
      %223 = vdwg.mxu0
      %v224 = vmax.f32 %v221, 0.0
      %v225 = vld [vmem:[%s3] sm:$0xff]
      %v226 = vld [vmem:[%s3 + $0x8] sm:$0xff]
      %v227 = vld [vmem:[%s3 + $0x10] sm:$0xff]
      %v228 = vld [vmem:[%s3 + $0x18] sm:$0xff]
      %v229 = vld [vmem:[%s3 + $0x20] sm:$0xff]
      %v230 = vld [vmem:[%s3 + $0x28] sm:$0xff]
      %v231 = vld [vmem:[%s3 + $0x30] sm:$0xff]
      %v232 = vld [vmem:[%s3 + $0x38] sm:$0xff]
      %v233 = vld [vmem:[%s4] sm:$0x1]
      %v235 = vlaneseq
      %v236 = vshrl.u32 %v235, 7
      %v237 = vsub.s32 0, %v236
      %v238 = vrot.slane %v233, %v237
      %vm240 = vcmask 523264
      %v242 = vsel %vm240, %v224, 0
      %244 = vmatprep.subr.mxu0 0.0
      %245 = vmatpush1.msra.mxu0 %v225
      %246 = vmatprep.subr.mxu0 0.0
      %247 = vmatpush1.msra.mxu0 %v226
      %248 = vmatprep.subr.mxu0 0.0
      %249 = vmatpush1.msra.mxu0 %v227
      %250 = vmatprep.subr.mxu0 0.0
      %251 = vmatpush1.msra.mxu0 %v228
      %252 = vmatprep.subr.mxu0 0.0
      %253 = vmatpush1.msra.mxu0 %v229
      %254 = vmatprep.subr.mxu0 0.0
      %255 = vmatpush1.msra.mxu0 %v230
      %256 = vmatprep.subr.mxu0 0.0
      %257 = vmatpush1.msra.mxu0 %v231
      %258 = vmatprep.subr.mxu0 0.0
      %259 = vmatpush1.msra.mxu0 %v232
      %260 = vmatprep.subr.mxu0 0.0
      %261 = vmatpush1.msra.mxu0 0.0
      %262 = vmatprep.subr.mxu0 0.0
      %263 = vmatpush1.msra.mxu0 0.0
      %264 = vmatprep.subr.mxu0 0.0
      %265 = vmatpush1.msra.mxu0 0.0
      %266 = vmatprep.subr.mxu0 0.0
      %267 = vmatpush1.msra.mxu0 0.0
      %268 = vmatprep.subr.mxu0 0.0
      %269 = vmatpush1.msra.mxu0 0.0
      %270 = vmatprep.subr.mxu0 0.0
      %271 = vmatpush1.msra.mxu0 0.0
      %272 = vmatprep.subr.mxu0 0.0
      %273 = vmatpush1.msra.mxu0 0.0
      %274 = vmatprep.subr.mxu0 0.0
      %275 = vmatpush1.msra.mxu0 0.0
      %276 = vmatprep.subr.mxu0 0.0
      %277 = vmatpush1.msra.mxu0 0.0
      %278 = vmatprep.subr.mxu0 0.0
      %279 = vmatpush1.msra.mxu0 0.0
      %280 = vmatprep.subr.mxu0 0.0
      %281 = vmatpush1.msra.mxu0 0.0
      %282 = vmatprep.subr.mxu0 0.0
      %283 = vmatpush1.msra.mxu0 0.0
      %284 = vmatprep.subr.mxu0 0.0
      %285 = vmatpush1.msra.mxu0 0.0
      %286 = vmatprep.subr.mxu0 0.0
      %287 = vmatpush1.msra.mxu0 0.0
      %288 = vmatprep.subr.mxu0 0.0
      %289 = vmatpush1.msra.mxu0 0.0
      %290 = vmatprep.subr.mxu0 0.0
      %291 = vmatpush1.msra.mxu0 0.0
      %292 = vmatprep.subr.mxu0 0.0
      %293 = vmatpush1.msra.mxu0 0.0
      %294 = vmatprep.subr.mxu0 0.0
      %295 = vmatpush1.msra.mxu0 0.0
      %296 = vmatprep.subr.mxu0 0.0
      %297 = vmatpush1.msra.mxu0 0.0
      %298 = vmatprep.subr.mxu0 0.0
      %299 = vmatpush1.msra.mxu0 0.0
      %300 = vmatprep.subr.mxu0 0.0
      %301 = vmatpush1.msra.mxu0 0.0
      %302 = vmatprep.subr.mxu0 0.0
      %303 = vmatpush1.msra.mxu0 0.0
      %304 = vmatprep.subr.mxu0 0.0
      %305 = vmatpush1.msra.mxu0 0.0
      %306 = vmatprep.subr.mxu0 0.0
      %307 = vmatpush1.msra.mxu0 0.0
      %308 = vmatprep.mubr.f32.mxu0 0.0
      %309 = vmatmul.mubr.f32.gmra.mrb[0].mxu0 %v242
      %v310 = vpop.f32.mrb[0].mxu0
      %v311 = vadd.f32 %v238, %v310
      %v312 = vpop.f32.mrb[0].mxu0
      %313 = vdwg.mxu0
      %v314 = vld [vmem:[%s5] sm:$0xff]
      %v315 = vlaneseq
      %v316 = vand.u32 %v315, 127
      %vm317 = vcmask 31744
      %v318 = vsel %vm317, %v311, -inf
      %319 = vmax.xlane.f32.xlu0 %v318
      %v320 = vpop.xlane.xlu0 %319
      %v321 = vsub.f32 %v311, %v320
      %v322 = vmul.f32 %v321, 1.442695
      %v323 = vpow.pop %v322
      %v324 = vsel %vm317, %v323, 0.0
      %325 = vadd.xlane.f32.xlu0 %v324
      %v326 = vpop.xlane.xlu0 %325
      %v327 = vlog2.pop %v326
      %v328 = vmul.f32 %v327, 0.6931472
      %v329 = vadd.f32 %v320, %v328
      %v330 = vmul.f32 %v311, %v314
      %v331 = vsel %vm317, %v330, 0.0
      %332 = vadd.xlane.f32.xlu0 %v331
      %v333 = vpop.xlane.xlu0 %332
      %v334 = vsub.f32 %v329, %v333
      %vm335 = vcmp.eq.f32.partialorder %v311, %v320
      %v336 = vsel %vm335, %v316, 4
      %v337 = vsel %vm317, %v336, 2147483647
      %v338 = vand.u32 %v337, 65535
      %v339 = vshra.s32 %v337, 16
      %v340 = vcvt.s32.f32 %v338
      %v341 = vcvt.s32.f32 %v339
      %342 = vmin.xlane.f32.xlu0 %v341
      %v343 = vpop.xlane.xlu0 %342
      %vm344 = vcmp.eq.f32.partialorder %v341, %v343
      %v345 = vsel %vm344, %v340, inf
      %346 = vmin.xlane.f32.xlu0 %v345
      %v347 = vpop.xlane.xlu0 %346
      %v348 = vcvt.f32.s32 %v347
      %v349 = vcvt.f32.s32 %v343
      %v350 = vshll.u32 %v349, 16
      %v351 = vadd.s32 %v350, %v348
      %vm352 = vcmp.eq.s32.totalorder %v316, %v351
      %v353 = vsel %vm352, %v314, 0.0
      %v354 = vsel %vm317, %v353, 0.0
      %355 = vadd.xlane.f32.xlu0 %v354
      %v356 = vpop.xlane.xlu0 %355
      %v358 = vlaneseq
      %v359 = vshrl.u32 %v358, 7
      %v360 = vsub.s32 %v316, %v359
      %v361 = vrot.slane %v334, %v360
      %vm363 = vcmask 57344
      %364 = vst.msk [vmem:[#allocation6] sm:$0x1] %vm363, %v361
      %v366 = vlaneseq
      %v367 = vshrl.u32 %v366, 7
      %v368 = vsub.s32 %v316, %v367
      %v369 = vrot.slane %v356, %v368
      %371 = vst.msk [vmem:[#allocation6 + $0x1] sm:$0x1] %vm363, %v369
    $region37: #{tpu_custom_call.1} parent=1 // pred_fallthru
      _
    // Predicated region
    $region38: #{tpu_custom_call.1} parent=1 // pred_check
      _
    $region39: #{tpu_custom_call.1} parent=1 // pred_check_branch
      %373 = sbr.rel (0) target = $region41
    $region40: #{tpu_custom_call.1} parent=1 // pred_region
      %s375 = ssub.s32 32, 32
      %376 = vsyncadd [#allocation5], %s375
      %s378 = sshll.u32 [#allocation6], 4
      %s379 = int_to_ptr.vmem [resolvable:$true] %s378
      %381 = dma.vmem_to_hbm [thread:$0]  %s379, 32, %s6, [#allocation5]
    $region41: #{tpu_custom_call.1} parent=1 // pred_fallthru
      _
    // Predicated region
    $region42: #{tpu_custom_call.1} parent=1 // pred_check
      _
    $region43: #{tpu_custom_call.1} parent=1 // pred_check_branch
      %383 = sbr.rel (0) target = $region45
    $region44: #{tpu_custom_call.1} parent=1 // pred_region
      %384 = dma.done [#allocation5], 32
    $region45: #{tpu_custom_call.1} parent=1 // pred_fallthru
      _
    %385 = vsyncpa [#allocation4], 1
    %386 = vsyncpa [#allocation5], 1

</llo_original>
